<compile_context>
chip_gen: v6e
topology: v6e:2x2x1
jax: 0.10.0
libtpu: 0.0.40
codegen_flags: <defaults>
</compile_context>

<pallas_src>
import numpy as np
import jax
import jax.numpy as jnp
from jax.experimental import pallas as pl
from jax.experimental.pallas import tpu as pltpu

_MIB = 1024 * 1024


def _sublane_multiple(dtype) -> int:
    """Native sublane packing multiple: 8 (f32), 16 (bf16), 32 (int8/fp8)."""
    return max(8, 32 // max(1, jnp.dtype(dtype).itemsize))


def _vmem_capacity_bytes() -> int:
    """Physical VMEM per core; conservative (v7x-sized) fallback if probing fails."""
    try:
        cap = getattr(pltpu.get_tpu_info(), "vmem_capacity_bytes", None)
        if cap:
            return int(cap)
    except Exception:
        pass
    return 64 * _MIB


def _choose_row_tile(n_imgs, n_pad, in_isz, out_isz, target_bytes, sub):
    """Channel-images per block, sized from the f32 working set (not input bytes)."""
    # double-buffered input + output tiles plus ~5 live full-tile f32 temporaries
    per_row = n_pad * (2 * in_isz + 2 * out_isz + 5 * 4)
    tc_fit = max(1, int(target_bytes) // int(per_row))
    # keep the grid at several steps when alignment permits (pipelining / megacore)
    if n_imgs >= 4 * sub:
        min_steps = 4
    elif n_imgs >= 2 * sub:
        min_steps = 2
    else:
        min_steps = 1
    tc_cap = (n_imgs // min_steps) // sub * sub
    if tc_cap < sub:
        tc_cap = n_imgs
    tc = min(tc_fit, tc_cap, n_imgs)
    if tc >= n_imgs:
        return n_imgs
    return max(sub, (tc // sub) * sub)


def make_highpass(w_hpf: float):
    """Returns a callable implementing HighPass(w_hpf).forward for NCHW inputs."""
    scale = 1.0 / float(w_hpf)

    def highpass(x):
        B, C, H, W = x.shape
        n_imgs = B * C
        n_pix = H * W
        n_pad = ((n_pix + 127) // 128) * 128           # lane-dense, unmasked stores

        xf = x.reshape(n_imgs, n_pix)                   # free reshape (row-major)
        if n_pad != n_pix:
            xf = jnp.pad(xf, ((0, 0), (0, n_pad - n_pix)))

        # Boundary masks, precomputed host-side: (1, n_pad) f32 each, DMA'd once
        # (constant index_map) and broadcast across sublanes inside the kernel.
        idx = np.arange(n_pad)
        col, row, valid = idx % W, idx // W, idx < n_pix
        m_l = ((col != 0) & valid).astype(np.float32)[None, :]      # has a left  neighbour
        m_r = ((col != W - 1) & valid).astype(np.float32)[None, :]  # has a right neighbour
        m_u = ((row != 0) & valid).astype(np.float32)[None, :]      # has an upper neighbour
        m_d = ((row != H - 1) & valid).astype(np.float32)[None, :]  # has a lower neighbour
        masks = tuple(jnp.asarray(m) for m in (m_l, m_r, m_u, m_d))

        # Generation-aware tiling / VMEM budget.
        sub = _sublane_multiple(x.dtype)
        itemsize = x.dtype.itemsize
        vmem_limit = min(_vmem_capacity_bytes() // 2, 64 * _MIB)
        tc = _choose_row_tile(n_imgs, n_pad, itemsize, itemsize, vmem_limit // 2, sub)
        grid = (pl.cdiv(n_imgs, tc),)

        # Lane-rotation amounts (all non-negative; circular wrap is masked to zero).
        s_left = 1 % n_pad                 # source col w-1   (x[i-1])
        s_right = (n_pad - 1) % n_pad      # source col w+1   (x[i+1])
        s_up = W % n_pad                   # source row h-1   (h[i-W])
        s_down = (n_pad - W) % n_pad       # source row h+1   (h[i+W])

        def roll_lanes(v, s):
            return v if s == 0 else pltpu.roll(v, s, axis=1)

        def kernel(x_ref, ml_ref, mr_ref, mu_ref, md_ref, o_ref):
            xt = x_ref[...].astype(jnp.float32)                 # (tc, n_pad), lane-dense
            # Separable 3x3 box sum: horizontal pass (column-wrap masked) ...
            h = (xt
                 + roll_lanes(xt, s_left) * ml_ref[...]
                 + roll_lanes(xt, s_right) * mr_ref[...])
            # ... then vertical pass (image top/bottom wrap masked).
            box = (h
                   + roll_lanes(h, s_up) * mu_ref[...]
                   + roll_lanes(h, s_down) * md_ref[...])
            out = 9.0 * xt - box                                # == 8*x - sum(8 neighbours)
            if scale != 1.0:
                out = out * scale
            o_ref[...] = out.astype(o_ref.dtype)

        mask_spec = pl.BlockSpec((1, n_pad), lambda i: (0, 0))
        out = pl.pallas_call(
            kernel,
            out_shape=jax.ShapeDtypeStruct((n_imgs, n_pad), x.dtype),
            grid=grid,
            in_specs=[pl.BlockSpec((tc, n_pad), lambda i: (i, 0)),
                      mask_spec, mask_spec, mask_spec, mask_spec],
            out_specs=pl.BlockSpec((tc, n_pad), lambda i: (i, 0)),
            compiler_params=pltpu.CompilerParams(
                dimension_semantics=("parallel",),
                vmem_limit_bytes=int(vmem_limit)),
        )(xf, *masks)

        if n_pad != n_pix:
            out = out[:, :n_pix]
        return out.reshape(B, C, H, W)

    return highpass


def _reference_highpass(x, w_hpf: float):
    """Independent reference: grouped conv via lax.conv_general_dilated."""
    C = x.shape[1]
    f = (jnp.asarray([[-1.0, -1.0, -1.0],
                      [-1.0,  8.0, -1.0],
                      [-1.0, -1.0, -1.0]], dtype=jnp.float32) / w_hpf)
    rhs = jnp.broadcast_to(f[None, None], (C, 1, 3, 3))  # (O=C, I/groups=1, 3, 3)
    return jax.lax.conv_general_dilated(
        x.astype(jnp.float32), rhs,
        window_strides=(1, 1), padding=((1, 1), (1, 1)),
        dimension_numbers=("NCHW", "OIHW", "NCHW"),
        feature_group_count=C).astype(x.dtype)


if __name__ == "__main__":
    w_hpf = 1.0
    B, C, H, W = 2, 4, 16, 16
    key = jax.random.PRNGKey(0)
    x = jax.random.normal(key, (B, C, H, W), dtype=jnp.float32)

    highpass = make_highpass(w_hpf)
    y = jax.block_until_ready(highpass(x))

    y_ref = jax.block_until_ready(_reference_highpass(x, w_hpf))
    np.testing.assert_allclose(np.asarray(y), np.asarray(y_ref),
                               rtol=1e-5, atol=1e-5)
    print("KERNEL_OK")
</pallas_src>

<mosaic_0001>
module attributes {stable_mosaic.version = 11 : i64} {
  func.func @kernel(%arg0: i32, %arg1: memref<8x256xf32, #tpu.memory_space<vmem>>, %arg2: memref<1x256xf32, #tpu.memory_space<vmem>>, %arg3: memref<1x256xf32, #tpu.memory_space<vmem>>, %arg4: memref<1x256xf32, #tpu.memory_space<vmem>>, %arg5: memref<1x256xf32, #tpu.memory_space<vmem>>, %arg6: memref<8x256xf32, #tpu.memory_space<vmem>>) attributes {dimension_semantics = [#tpu.dimension_semantics<parallel>], iteration_bounds = array<i64: 1>, scalar_prefetch = 0 : i64, scratch_operands = 0 : i64, tpu.core_type = #tpu.core_type<tc>, window_params = [{transform_indices = @transform_0, window_bounds = array<i64: 8, 256>}, {pipeline_mode = #tpu.pipeline_mode<synchronous>, transform_indices = @transform_1, window_bounds = array<i64: 1, 256>}, {pipeline_mode = #tpu.pipeline_mode<synchronous>, transform_indices = @transform_2, window_bounds = array<i64: 1, 256>}, {pipeline_mode = #tpu.pipeline_mode<synchronous>, transform_indices = @transform_3, window_bounds = array<i64: 1, 256>}, {pipeline_mode = #tpu.pipeline_mode<synchronous>, transform_indices = @transform_4, window_bounds = array<i64: 1, 256>}, {transform_indices = @transform_5, window_bounds = array<i64: 8, 256>}]} {
    %c0 = arith.constant 0 : index
    %c0_0 = arith.constant 0 : index
    %0 = vector.load %arg1[%c0, %c0_0] : memref<8x256xf32, #tpu.memory_space<vmem>>, vector<8x256xf32>
    %c1_i32 = arith.constant 1 : i32
    %1 = tpu.dynamic_rotate %0 by %c1_i32 dim 1 : vector<8x256xf32>, i32 -> vector<8x256xf32>
    %c0_1 = arith.constant 0 : index
    %c0_2 = arith.constant 0 : index
    %2 = vector.load %arg2[%c0_1, %c0_2] : memref<1x256xf32, #tpu.memory_space<vmem>>, vector<1x256xf32>
    %3 = vector.broadcast %2 : vector<1x256xf32> to vector<8x256xf32>
    %4 = arith.mulf %1, %3 : vector<8x256xf32>
    %5 = arith.addf %0, %4 : vector<8x256xf32>
    %c255_i32 = arith.constant 255 : i32
    %6 = tpu.dynamic_rotate %0 by %c255_i32 dim 1 : vector<8x256xf32>, i32 -> vector<8x256xf32>
    %c0_3 = arith.constant 0 : index
    %c0_4 = arith.constant 0 : index
    %7 = vector.load %arg3[%c0_3, %c0_4] : memref<1x256xf32, #tpu.memory_space<vmem>>, vector<1x256xf32>
    %8 = vector.broadcast %7 : vector<1x256xf32> to vector<8x256xf32>
    %9 = arith.mulf %6, %8 : vector<8x256xf32>
    %10 = arith.addf %5, %9 : vector<8x256xf32>
    %c16_i32 = arith.constant 16 : i32
    %11 = tpu.dynamic_rotate %10 by %c16_i32 dim 1 : vector<8x256xf32>, i32 -> vector<8x256xf32>
    %c0_5 = arith.constant 0 : index
    %c0_6 = arith.constant 0 : index
    %12 = vector.load %arg4[%c0_5, %c0_6] : memref<1x256xf32, #tpu.memory_space<vmem>>, vector<1x256xf32>
    %13 = vector.broadcast %12 : vector<1x256xf32> to vector<8x256xf32>
    %14 = arith.mulf %11, %13 : vector<8x256xf32>
    %15 = arith.addf %10, %14 : vector<8x256xf32>
    %c240_i32 = arith.constant 240 : i32
    %16 = tpu.dynamic_rotate %10 by %c240_i32 dim 1 : vector<8x256xf32>, i32 -> vector<8x256xf32>
    %c0_7 = arith.constant 0 : index
    %c0_8 = arith.constant 0 : index
    %17 = vector.load %arg5[%c0_7, %c0_8] : memref<1x256xf32, #tpu.memory_space<vmem>>, vector<1x256xf32>
    %18 = vector.broadcast %17 : vector<1x256xf32> to vector<8x256xf32>
    %19 = arith.mulf %16, %18 : vector<8x256xf32>
    %20 = arith.addf %15, %19 : vector<8x256xf32>
    %cst = arith.constant 9.000000e+00 : f32
    %21 = vector.broadcast %cst : f32 to vector<8x256xf32>
    %22 = arith.mulf %21, %0 : vector<8x256xf32>
    %23 = arith.subf %22, %20 : vector<8x256xf32>
    %c0_9 = arith.constant 0 : index
    %c0_10 = arith.constant 0 : index
    %24 = vector.load %arg6[%c0_9, %c0_10] : memref<8x256xf32, #tpu.memory_space<vmem>>, vector<8x256xf32>
    tpu.vector_store %arg6[%c0_9, %c0_10], %23 {strides = array<i32>} : memref<8x256xf32, #tpu.memory_space<vmem>>, vector<8x256xf32>,
    return
  }
  func.func @transform_0(%arg0: i32) -> (i32, i32) {
    %c0_i32 = arith.constant 0 : i32
    %c0_i32_0 = arith.constant 0 : i32
    return %arg0, %c0_i32 : i32, i32
  }
  func.func @transform_1(%arg0: i32) -> (i32, i32) {
    %c0_i32 = arith.constant 0 : i32
    %c0_i32_0 = arith.constant 0 : i32
    %c0_i32_1 = arith.constant 0 : i32
    return %c0_i32, %c0_i32_0 : i32, i32
  }
  func.func @transform_2(%arg0: i32) -> (i32, i32) {
    %c0_i32 = arith.constant 0 : i32
    %c0_i32_0 = arith.constant 0 : i32
    %c0_i32_1 = arith.constant 0 : i32
    return %c0_i32, %c0_i32_0 : i32, i32
  }
  func.func @transform_3(%arg0: i32) -> (i32, i32) {
    %c0_i32 = arith.constant 0 : i32
    %c0_i32_0 = arith.constant 0 : i32
    %c0_i32_1 = arith.constant 0 : i32
    return %c0_i32, %c0_i32_0 : i32, i32
  }
  func.func @transform_4(%arg0: i32) -> (i32, i32) {
    %c0_i32 = arith.constant 0 : i32
    %c0_i32_0 = arith.constant 0 : i32
    %c0_i32_1 = arith.constant 0 : i32
    return %c0_i32, %c0_i32_0 : i32, i32
  }
  func.func @transform_5(%arg0: i32) -> (i32, i32) {
    %c0_i32 = arith.constant 0 : i32
    %c0_i32_0 = arith.constant 0 : i32
    return %arg0, %c0_i32 : i32, i32
  }
}

</mosaic_0001>

<llo_original>
// kernel: tpu_custom_call.1
$region0: #{tpu_custom_call.1}
  #allocation0 [shape = 'u32[]', space=smem, size = 0x4, offset = 0x4, fixed_abs, tag = 'smem constant byte address 0x4 - core index']
  #allocation1 [shape = 'u32[144,128]{1,0:T(1,128)}', space=vmem, size = 0x12000, scoped, tag = 'internal scratch']
  %s0 = inlined_call_operand.hbm [shape: f32[8,256], index: 0, kind: input, shape index: {}]
  %s1 = inlined_call_operand.hbm [shape: f32[1,256], index: 1, kind: input, shape index: {}]
  %s2 = inlined_call_operand.vmem [shape: f32[1,256], index: 2, kind: input, shape index: {}]
  %s3 = inlined_call_operand.vmem [shape: f32[1,256], index: 3, kind: input, shape index: {}]
  %s4 = inlined_call_operand.vmem [shape: f32[1,256], index: 4, kind: input, shape index: {}]
  %s5 = inlined_call_operand.hbm [shape: f32[8,256], index: 5, kind: output, shape index: {}]
  %s6 = sld [smem:[#allocation0]]
  $region38: #{tpu_custom_call.1} parent=0
    _
  %s8 = ssub.s32 1, %s6
  %s9 = scalar_select 0, %s8, %s6
  $region1: #{tpu_custom_call.1} parent=0
    #allocation2 [shape = 'u8[8192]{0}', space=vmem, size = 0x2000, scoped, tag = 'input window, operand 0, single buffered']
    #allocation3 [shape = 's32[1]{0}', space=sflag, size = 0x4, scoped, tag = 'scoped memory for tpu_custom_call.1']
    #allocation4 [shape = 's32[1]{0}', space=sflag, size = 0x4, scoped, tag = 'scoped memory for tpu_custom_call.1']
    #allocation5 [shape = 'u8[1024]{0}', space=vmem, size = 0x400, scoped, tag = 'input window, operand 1, single buffered']
    #allocation6 [shape = 's32[1]{0}', space=sflag, size = 0x4, scoped, tag = 'scoped memory for tpu_custom_call.1']
    #allocation7 [shape = 'u8[8192]{0}', space=vmem, size = 0x2000, scoped, tag = 'output window, operand 0, single buffered']
    %10 = vsyncpa [#allocation3], 0
    %11 = vsyncpa [#allocation6], 0
    %12 = vsyncpa [#allocation4], 0
    // Predicated region
    $region2: #{tpu_custom_call.1} parent=1 // pred_check
      _
    $region3: #{tpu_custom_call.1} parent=1 // pred_check_branch
      %14 = sbr.rel (0) target = $region5
    $region4: #{tpu_custom_call.1} parent=1 // pred_region
      %s16 = ssub.s32 256, 256
      %17 = vsyncadd [#allocation3], %s16
      %s19 = sshll.u32 [#allocation2], 4
      %s20 = int_to_ptr.vmem [resolvable:$true] %s19
      %22 = dma.hbm_to_vmem [thread:$0]  %s0, 256, %s20, [#allocation3]
    $region5: #{tpu_custom_call.1} parent=1 // pred_fallthru
      _
    // Predicated region
    $region6: #{tpu_custom_call.1} parent=1 // pred_check
      _
    $region7: #{tpu_custom_call.1} parent=1 // pred_check_branch
      %24 = sbr.rel (0) target = $region9
    $region8: #{tpu_custom_call.1} parent=1 // pred_region
      %s26 = ssub.s32 32, 32
      %27 = vsyncadd [#allocation6], %s26
      %s29 = sshll.u32 [#allocation5], 4
      %s30 = int_to_ptr.vmem [resolvable:$true] %s29
      %32 = dma.hbm_to_vmem [thread:$0]  %s1, 32, %s30, [#allocation6]
    $region9: #{tpu_custom_call.1} parent=1 // pred_fallthru
      _
    // Predicated region
    $region10: #{tpu_custom_call.1} parent=1 // pred_check
      _
    $region11: #{tpu_custom_call.1} parent=1 // pred_check_branch
      %34 = sbr.rel (0) target = $region13
    $region12: #{tpu_custom_call.1} parent=1 // pred_region
      _
    $region13: #{tpu_custom_call.1} parent=1 // pred_fallthru
      _
    // Predicated region
    $region14: #{tpu_custom_call.1} parent=1 // pred_check
      _
    $region15: #{tpu_custom_call.1} parent=1 // pred_check_branch
      %36 = sbr.rel (0) target = $region17
    $region16: #{tpu_custom_call.1} parent=1 // pred_region
      _
    $region17: #{tpu_custom_call.1} parent=1 // pred_fallthru
      _
    // Predicated region
    $region18: #{tpu_custom_call.1} parent=1 // pred_check
      _
    $region19: #{tpu_custom_call.1} parent=1 // pred_check_branch
      %38 = sbr.rel (0) target = $region21
    $region20: #{tpu_custom_call.1} parent=1 // pred_region
      _
    $region21: #{tpu_custom_call.1} parent=1 // pred_fallthru
      _
    // Predicated region
    $region22: #{tpu_custom_call.1} parent=1 // pred_check
      _
    $region23: #{tpu_custom_call.1} parent=1 // pred_check_branch
      %40 = sbr.rel (0) target = $region25
    $region24: #{tpu_custom_call.1} parent=1 // pred_region
      %41 = dma.done [#allocation3], 256
    $region25: #{tpu_custom_call.1} parent=1 // pred_fallthru
      _
    // Predicated region
    $region26: #{tpu_custom_call.1} parent=1 // pred_check
      _
    $region27: #{tpu_custom_call.1} parent=1 // pred_check_branch
      %43 = sbr.rel (0) target = $region29
    $region28: #{tpu_custom_call.1} parent=1 // pred_region
      %44 = dma.done [#allocation6], 32
    $region29: #{tpu_custom_call.1} parent=1 // pred_fallthru
      _
    %v45 = vld [vmem:[#allocation2] sm:$0xff]
    %v46 = vld [vmem:[#allocation2 + $0x8] sm:$0xff]
    %47 = vrot.lane.b32.xlu0 %v45, 1
    %v48 = vpop.permute.xlu0 %47
    %49 = vrot.lane.b32.xlu0 %v46, 1
    %v50 = vpop.permute.xlu0 %49
    %v51 = vlaneseq
    %v52 = vand.u32 %v51, 127
    %vm53 = vcmp.lt.s32.totalorder %v52, 1
    %v54 = vsel %vm53, %v48, %v50
    %v55 = vsel %vm53, %v50, %v48
    %v56 = vld [vmem:[#allocation5] sm:$0x3]
    %v58 = vlaneseq
    %v59 = vshrl.u32 %v58, 7
    %v60 = vsub.s32 0, %v59
    %v61 = vrot.slane %v56, %v60
    %v62 = vlaneseq
    %v63 = vshrl.u32 %v62, 7
    %v64 = vsub.s32 1, %v63
    %v65 = vrot.slane %v56, %v64
    %v68 = vmul.f32 %v55, %v61
    %v69 = vmul.f32 %v54, %v65
    %v70 = vadd.f32 %v45, %v68
    %v71 = vadd.f32 %v46, %v69
    %72 = vrot.lane.b32.xlu0 %v45, 127
    %v73 = vpop.permute.xlu0 %72
    %74 = vrot.lane.b32.xlu0 %v46, 127
    %v75 = vpop.permute.xlu0 %74
    %vm76 = vcmp.lt.s32.totalorder %v52, 127
    %v77 = vsel %vm76, %v73, %v75
    %v78 = vsel %vm76, %v75, %v73
    %v79 = vld [vmem:[%s2] sm:$0x3]
    %v81 = vlaneseq
    %v82 = vshrl.u32 %v81, 7
    %v83 = vsub.s32 0, %v82
    %v84 = vrot.slane %v79, %v83
    %v85 = vlaneseq
    %v86 = vshrl.u32 %v85, 7
    %v87 = vsub.s32 1, %v86
    %v88 = vrot.slane %v79, %v87
    %v91 = vmul.f32 %v77, %v84
    %v92 = vmul.f32 %v78, %v88
    %v93 = vadd.f32 %v70, %v91
    %v94 = vadd.f32 %v71, %v92
    %95 = vrot.lane.b32.xlu0 %v93, 16
    %v96 = vpop.permute.xlu0 %95
    %97 = vrot.lane.b32.xlu0 %v94, 16
    %v98 = vpop.permute.xlu0 %97
    %vm99 = vcmp.lt.s32.totalorder %v52, 16
    %v100 = vsel %vm99, %v96, %v98
    %v101 = vsel %vm99, %v98, %v96
    %v102 = vld [vmem:[%s3] sm:$0x3]
    %v104 = vlaneseq
    %v105 = vshrl.u32 %v104, 7
    %v106 = vsub.s32 0, %v105
    %v107 = vrot.slane %v102, %v106
    %v108 = vlaneseq
    %v109 = vshrl.u32 %v108, 7
    %v110 = vsub.s32 1, %v109
    %v111 = vrot.slane %v102, %v110
    %v114 = vmul.f32 %v101, %v107
    %v115 = vmul.f32 %v100, %v111
    %v116 = vadd.f32 %v93, %v114
    %v117 = vadd.f32 %v94, %v115
    %118 = vrot.lane.b32.xlu0 %v93, 112
    %v119 = vpop.permute.xlu0 %118
    %120 = vrot.lane.b32.xlu0 %v94, 112
    %v121 = vpop.permute.xlu0 %120
    %vm122 = vcmp.lt.s32.totalorder %v52, 112
    %v123 = vsel %vm122, %v119, %v121
    %v124 = vsel %vm122, %v121, %v119
    %v125 = vld [vmem:[%s4] sm:$0x3]
    %v127 = vlaneseq
    %v128 = vshrl.u32 %v127, 7
    %v129 = vsub.s32 0, %v128
    %v130 = vrot.slane %v125, %v129
    %v131 = vlaneseq
    %v132 = vshrl.u32 %v131, 7
    %v133 = vsub.s32 1, %v132
    %v134 = vrot.slane %v125, %v133
    %v137 = vmul.f32 %v123, %v130
    %v138 = vmul.f32 %v124, %v134
    %v139 = vadd.f32 %v116, %v137
    %v140 = vadd.f32 %v117, %v138
    %v141 = vmul.f32 %v45, 9.0
    %v142 = vmul.f32 %v46, 9.0
    %v143 = vsub.f32 %v141, %v139
    %v144 = vsub.f32 %v142, %v140
    %145 = vst [vmem:[#allocation7] sm:$0xff] %v143
    %146 = vst [vmem:[#allocation7 + $0x8] sm:$0xff] %v144
    // Predicated region
    $region30: #{tpu_custom_call.1} parent=1 // pred_check
      _
    $region31: #{tpu_custom_call.1} parent=1 // pred_check_branch
      %148 = sbr.rel (0) target = $region33
    $region32: #{tpu_custom_call.1} parent=1 // pred_region
      %s150 = ssub.s32 256, 256
      %151 = vsyncadd [#allocation4], %s150
      %s153 = sshll.u32 [#allocation7], 4
      %s154 = int_to_ptr.vmem [resolvable:$true] %s153
      %156 = dma.vmem_to_hbm [thread:$0]  %s154, 256, %s5, [#allocation4]
    $region33: #{tpu_custom_call.1} parent=1 // pred_fallthru
      _
    // Predicated region
    $region34: #{tpu_custom_call.1} parent=1 // pred_check
      _
    $region35: #{tpu_custom_call.1} parent=1 // pred_check_branch
      %158 = sbr.rel (0) target = $region37
    $region36: #{tpu_custom_call.1} parent=1 // pred_region
      %159 = dma.done [#allocation4], 256
    $region37: #{tpu_custom_call.1} parent=1 // pred_fallthru
      _
    %160 = vsyncpa [#allocation3], 1
    %161 = vsyncpa [#allocation6], 1
    %162 = vsyncpa [#allocation4], 1

</llo_original>
